<compile_context>
chip_gen: v7x
topology: tpu7x:2x2x1
jax: 0.10.0
libtpu: 0.0.40
codegen_flags: <defaults>
</compile_context>

<pallas_src>
import jax
import jax.numpy as jnp
from jax import lax
from jax.experimental import pallas as pl
from jax.experimental.pallas import tpu as pltpu


def lstm_encoder_kernel(x_ref, hc0_ref, w_ref, out_ref, hcn_ref):
    # x_ref:   (T, B, I)    time-major input sequence
    # hc0_ref: (2, B, H)    [h0 ; c0]
    # w_ref:   (I+H+1, 4H)  [W_ih^T ; W_hh^T ; b_ih + b_hh]
    # out_ref: (T, B, H)    per-step hidden states
    # hcn_ref: (2, B, H)    [h_T ; c_T]
    T, B, I = x_ref.shape
    H = hc0_ref.shape[-1]

    # Weights stay resident in VMEM; loaded once, outside the loop.
    w_cat = w_ref[: I + H, :]                   # (I+H, 4H)
    bias = w_ref[I + H:I + H + 1, :]            # (1, 4H)

    h0 = hc0_ref[0]                             # (B, H)
    c0 = hc0_ref[1]                             # (B, H)

    def step(t, carry):
        h, c = carry
        x_t = x_ref[t]                                            # (B, I)
        xh = jnp.concatenate([x_t, h], axis=1)                    # (B, I+H)
        gates = (jnp.dot(xh, w_cat, preferred_element_type=jnp.float32)
                 + bias)                                          # (B, 4H)
        # One sigmoid + one tanh over the full 4H(=128)-lane gates vreg,
        # then static lane slices.  PyTorch gate order: i, f, g, o.
        sg = jax.nn.sigmoid(gates)
        th = jnp.tanh(gates)
        i_g = sg[:, 0:H]
        f_g = sg[:, H:2 * H]
        g_g = th[:, 2 * H:3 * H]
        o_g = sg[:, 3 * H:4 * H]
        c_new = f_g * c + i_g * g_g
        h_new = o_g * jnp.tanh(c_new)
        out_ref[t] = h_new
        return (h_new, c_new)

    h_n, c_n = lax.fori_loop(0, T, step, (h0, c0), unroll=True)
    hcn_ref[0] = h_n
    hcn_ref[1] = c_n


def prepare_params(p):
    """One-time host-side packing of the LSTM parameters.

    Returns a single (I+H+1, 4H) f32 buffer: [W_ih^T ; W_hh^T ; b_ih+b_hh].
    """
    w = jnp.concatenate(
        [p["W_ih"].T, p["W_hh"].T, (p["b_ih"] + p["b_hh"])[None, :]], axis=0)
    return w.astype(jnp.float32)


def encoder_forward(state, hidden, w_packed):
    """state: (B, T, I) batch_first; hidden: (h0, c0), each (1, B, H)."""
    B, T, I = state.shape
    H = hidden[0].shape[-1]

    x_t = jnp.transpose(state, (1, 0, 2))                    # (T, B, I)
    hc0 = jnp.concatenate([hidden[0], hidden[1]], axis=0)    # (2, B, H)

    vmem = pl.BlockSpec(memory_space=pltpu.MemorySpace.VMEM)
    out_seq, hcn = pl.pallas_call(
        lstm_encoder_kernel,
        out_shape=(
            jax.ShapeDtypeStruct((T, B, H), jnp.float32),
            jax.ShapeDtypeStruct((2, B, H), jnp.float32),
        ),
        in_specs=[vmem, vmem, vmem],
        out_specs=(vmem, vmem),
    )(x_t, hc0, w_packed)

    output = jnp.transpose(out_seq, (1, 0, 2))               # (B, T, H)
    # match PyTorch: output (B, T, H), (h_n, c_n) each (1, B, H)
    return output, (hcn[0:1], hcn[1:2])


encoder_forward_jit = jax.jit(encoder_forward)


def encoder_reference(state, hidden, p):
    """Pure-JAX reference of nn.LSTM(batch_first=True) forward."""
    B, T, I = state.shape
    h = hidden[0][0]
    c = hidden[1][0]
    H = h.shape[-1]
    outs = []
    for t in range(T):
        x = state[:, t, :]
        gates = x @ p["W_ih"].T + p["b_ih"] + h @ p["W_hh"].T + p["b_hh"]
        i = jax.nn.sigmoid(gates[:, 0:H])
        f = jax.nn.sigmoid(gates[:, H:2 * H])
        g = jnp.tanh(gates[:, 2 * H:3 * H])
        o = jax.nn.sigmoid(gates[:, 3 * H:4 * H])
        c = f * c + i * g
        h = o * jnp.tanh(c)
        outs.append(h)
    output = jnp.stack(outs, axis=1)                         # (B, T, H)
    return output, (h[None], c[None])


if __name__ == "__main__":
    B, T, num_inputs, num_hidden = 2, 8, 16, 32
    I, H = num_inputs, num_hidden

    key = jax.random.PRNGKey(0)
    ks = jax.random.split(key, 8)

    def u(k, shape, scale=0.1):
        return jax.random.uniform(k, shape, jnp.float32, -scale, scale)

    # parameters (PyTorch nn.LSTM conventions: W_ih (4H, I), W_hh (4H, H))
    p = {
        "W_ih": u(ks[0], (4 * H, I)),
        "W_hh": u(ks[1], (4 * H, H)),
        "b_ih": u(ks[2], (4 * H,)),
        "b_hh": u(ks[3], (4 * H,)),
    }

    # inputs: state (B, T, I) batch_first; hidden = (h0, c0) each (1, B, H)
    state = u(ks[4], (B, T, I), 1.0)
    h0 = u(ks[5], (1, B, H), 1.0)
    c0 = u(ks[6], (1, B, H), 1.0)
    hidden = (h0, c0)

    w_packed = prepare_params(p)  # one-time packing (hoisted out of forward)

    output, (h_n, c_n) = encoder_forward_jit(state, hidden, w_packed)
    jax.block_until_ready((output, h_n, c_n))

    ref_out, (ref_h, ref_c) = encoder_reference(state, hidden, p)
    assert jnp.allclose(output, ref_out, atol=1e-5, rtol=1e-5)
    assert jnp.allclose(h_n, ref_h, atol=1e-5, rtol=1e-5)
    assert jnp.allclose(c_n, ref_c, atol=1e-5, rtol=1e-5)

    print("KERNEL_OK")
</pallas_src>

<mosaic_0001>
module attributes {stable_mosaic.version = 11 : i64} {
  func.func @lstm_encoder_kernel(%arg0: memref<8x2x16xf32, #tpu.memory_space<vmem>>, %arg1: memref<2x2x32xf32, #tpu.memory_space<vmem>>, %arg2: memref<49x128xf32, #tpu.memory_space<vmem>>, %arg3: memref<8x2x32xf32, #tpu.memory_space<vmem>>, %arg4: memref<2x2x32xf32, #tpu.memory_space<vmem>>) attributes {dimension_semantics = [], scalar_prefetch = 0 : i64, scratch_operands = 0 : i64, tpu.core_type = #tpu.core_type<tc>} {
    %c0 = arith.constant 0 : index
    %c0_0 = arith.constant 0 : index
    %0 = vector.load %arg2[%c0, %c0_0] : memref<49x128xf32, #tpu.memory_space<vmem>>, vector<48x128xf32>
    %c48 = arith.constant 48 : index
    %c0_1 = arith.constant 0 : index
    %1 = vector.load %arg2[%c48, %c0_1] : memref<49x128xf32, #tpu.memory_space<vmem>>, vector<1x128xf32>
    %c0_2 = arith.constant 0 : index
    %c0_3 = arith.constant 0 : index
    %c0_4 = arith.constant 0 : index
    %2 = vector.load %arg1[%c0_2, %c0_3, %c0_4] : memref<2x2x32xf32, #tpu.memory_space<vmem>>, vector<1x2x32xf32>
    %3 = vector.shape_cast %2 : vector<1x2x32xf32> to vector<2x32xf32>
    %c1 = arith.constant 1 : index
    %c0_5 = arith.constant 0 : index
    %c0_6 = arith.constant 0 : index
    %4 = vector.load %arg1[%c1, %c0_5, %c0_6] : memref<2x2x32xf32, #tpu.memory_space<vmem>>, vector<1x2x32xf32>
    %5 = vector.shape_cast %4 : vector<1x2x32xf32> to vector<2x32xf32>
    %c0_i32 = arith.constant 0 : i32
    %6 = arith.index_cast %c0_i32 : i32 to index
    %c0_7 = arith.constant 0 : index
    %c0_8 = arith.constant 0 : index
    %7 = vector.load %arg0[%6, %c0_7, %c0_8] : memref<8x2x16xf32, #tpu.memory_space<vmem>>, vector<1x2x16xf32>
    %8 = vector.shape_cast %7 : vector<1x2x16xf32> to vector<2x16xf32>
    %9 = tpu.concatenate %8, %3 in 1 : vector<2x16xf32>, vector<2x32xf32> -> vector<2x48xf32>
    %cst = arith.constant dense<0.000000e+00> : vector<2x128xf32>
    %10 = tpu.matmul %9, %0, %cst {dimension_numbers = #tpu.dot_dimension_numbers<[1], [0], [0], [1], [0, 0, 1, 1], [], []>} : vector<2x48xf32>, vector<48x128xf32>, vector<2x128xf32> -> vector<2x128xf32>
    %11 = vector.broadcast %1 : vector<1x128xf32> to vector<2x128xf32>
    %12 = arith.addf %10, %11 : vector<2x128xf32>
    %13 = arith.negf %12 : vector<2x128xf32>
    %14 = math.exp %13 : vector<2x128xf32>
    %cst_9 = arith.constant 1.000000e+00 : f32
    %15 = vector.broadcast %cst_9 : f32 to vector<2x128xf32>
    %16 = arith.addf %15, %14 : vector<2x128xf32>
    %17 = arith.divf %15, %16 : vector<2x128xf32>
    %18 = math.tanh %12 : vector<2x128xf32>
    %19 = vector.extract_strided_slice %17 {offsets = [0, 0], sizes = [2, 32], strides = [1, 1]} : vector<2x128xf32> to vector<2x32xf32>
    %20 = vector.extract_strided_slice %17 {offsets = [0, 32], sizes = [2, 32], strides = [1, 1]} : vector<2x128xf32> to vector<2x32xf32>
    %21 = vector.extract_strided_slice %18 {offsets = [0, 64], sizes = [2, 32], strides = [1, 1]} : vector<2x128xf32> to vector<2x32xf32>
    %22 = vector.extract_strided_slice %17 {offsets = [0, 96], sizes = [2, 32], strides = [1, 1]} : vector<2x128xf32> to vector<2x32xf32>
    %23 = arith.mulf %20, %5 : vector<2x32xf32>
    %24 = arith.mulf %19, %21 : vector<2x32xf32>
    %25 = arith.addf %23, %24 : vector<2x32xf32>
    %26 = math.tanh %25 : vector<2x32xf32>
    %27 = arith.mulf %22, %26 : vector<2x32xf32>
    %28 = arith.index_cast %c0_i32 : i32 to index
    %c0_10 = arith.constant 0 : index
    %c0_11 = arith.constant 0 : index
    %29 = vector.load %arg3[%28, %c0_10, %c0_11] : memref<8x2x32xf32, #tpu.memory_space<vmem>>, vector<1x2x32xf32>
    %30 = vector.shape_cast %29 : vector<1x2x32xf32> to vector<2x32xf32>
    %31 = vector.shape_cast %27 : vector<2x32xf32> to vector<1x2x32xf32>
    tpu.vector_store %arg3[%28, %c0_10, %c0_11], %31 {strides = array<i32>} : memref<8x2x32xf32, #tpu.memory_space<vmem>>, vector<1x2x32xf32>,
    %c1_i32 = arith.constant 1 : i32
    %32 = arith.index_cast %c1_i32 : i32 to index
    %c0_12 = arith.constant 0 : index
    %c0_13 = arith.constant 0 : index
    %33 = vector.load %arg0[%32, %c0_12, %c0_13] : memref<8x2x16xf32, #tpu.memory_space<vmem>>, vector<1x2x16xf32>
    %34 = vector.shape_cast %33 : vector<1x2x16xf32> to vector<2x16xf32>
    %35 = tpu.concatenate %34, %27 in 1 : vector<2x16xf32>, vector<2x32xf32> -> vector<2x48xf32>
    %cst_14 = arith.constant dense<0.000000e+00> : vector<2x128xf32>
    %36 = tpu.matmul %35, %0, %cst_14 {dimension_numbers = #tpu.dot_dimension_numbers<[1], [0], [0], [1], [0, 0, 1, 1], [], []>} : vector<2x48xf32>, vector<48x128xf32>, vector<2x128xf32> -> vector<2x128xf32>
    %37 = vector.broadcast %1 : vector<1x128xf32> to vector<2x128xf32>
    %38 = arith.addf %36, %37 : vector<2x128xf32>
    %39 = arith.negf %38 : vector<2x128xf32>
    %40 = math.exp %39 : vector<2x128xf32>
    %cst_15 = arith.constant 1.000000e+00 : f32
    %41 = vector.broadcast %cst_15 : f32 to vector<2x128xf32>
    %42 = arith.addf %41, %40 : vector<2x128xf32>
    %43 = arith.divf %41, %42 : vector<2x128xf32>
    %44 = math.tanh %38 : vector<2x128xf32>
    %45 = vector.extract_strided_slice %43 {offsets = [0, 0], sizes = [2, 32], strides = [1, 1]} : vector<2x128xf32> to vector<2x32xf32>
    %46 = vector.extract_strided_slice %43 {offsets = [0, 32], sizes = [2, 32], strides = [1, 1]} : vector<2x128xf32> to vector<2x32xf32>
    %47 = vector.extract_strided_slice %44 {offsets = [0, 64], sizes = [2, 32], strides = [1, 1]} : vector<2x128xf32> to vector<2x32xf32>
    %48 = vector.extract_strided_slice %43 {offsets = [0, 96], sizes = [2, 32], strides = [1, 1]} : vector<2x128xf32> to vector<2x32xf32>
    %49 = arith.mulf %46, %25 : vector<2x32xf32>
    %50 = arith.mulf %45, %47 : vector<2x32xf32>
    %51 = arith.addf %49, %50 : vector<2x32xf32>
    %52 = math.tanh %51 : vector<2x32xf32>
    %53 = arith.mulf %48, %52 : vector<2x32xf32>
    %54 = arith.index_cast %c1_i32 : i32 to index
    %c0_16 = arith.constant 0 : index
    %c0_17 = arith.constant 0 : index
    %55 = vector.load %arg3[%54, %c0_16, %c0_17] : memref<8x2x32xf32, #tpu.memory_space<vmem>>, vector<1x2x32xf32>
    %56 = vector.shape_cast %55 : vector<1x2x32xf32> to vector<2x32xf32>
    %57 = vector.shape_cast %53 : vector<2x32xf32> to vector<1x2x32xf32>
    tpu.vector_store %arg3[%54, %c0_16, %c0_17], %57 {strides = array<i32>} : memref<8x2x32xf32, #tpu.memory_space<vmem>>, vector<1x2x32xf32>,
    %c2_i32 = arith.constant 2 : i32
    %58 = arith.index_cast %c2_i32 : i32 to index
    %c0_18 = arith.constant 0 : index
    %c0_19 = arith.constant 0 : index
    %59 = vector.load %arg0[%58, %c0_18, %c0_19] : memref<8x2x16xf32, #tpu.memory_space<vmem>>, vector<1x2x16xf32>
    %60 = vector.shape_cast %59 : vector<1x2x16xf32> to vector<2x16xf32>
    %61 = tpu.concatenate %60, %53 in 1 : vector<2x16xf32>, vector<2x32xf32> -> vector<2x48xf32>
    %cst_20 = arith.constant dense<0.000000e+00> : vector<2x128xf32>
    %62 = tpu.matmul %61, %0, %cst_20 {dimension_numbers = #tpu.dot_dimension_numbers<[1], [0], [0], [1], [0, 0, 1, 1], [], []>} : vector<2x48xf32>, vector<48x128xf32>, vector<2x128xf32> -> vector<2x128xf32>
    %63 = vector.broadcast %1 : vector<1x128xf32> to vector<2x128xf32>
    %64 = arith.addf %62, %63 : vector<2x128xf32>
    %65 = arith.negf %64 : vector<2x128xf32>
    %66 = math.exp %65 : vector<2x128xf32>
    %cst_21 = arith.constant 1.000000e+00 : f32
    %67 = vector.broadcast %cst_21 : f32 to vector<2x128xf32>
    %68 = arith.addf %67, %66 : vector<2x128xf32>
    %69 = arith.divf %67, %68 : vector<2x128xf32>
    %70 = math.tanh %64 : vector<2x128xf32>
    %71 = vector.extract_strided_slice %69 {offsets = [0, 0], sizes = [2, 32], strides = [1, 1]} : vector<2x128xf32> to vector<2x32xf32>
    %72 = vector.extract_strided_slice %69 {offsets = [0, 32], sizes = [2, 32], strides = [1, 1]} : vector<2x128xf32> to vector<2x32xf32>
    %73 = vector.extract_strided_slice %70 {offsets = [0, 64], sizes = [2, 32], strides = [1, 1]} : vector<2x128xf32> to vector<2x32xf32>
    %74 = vector.extract_strided_slice %69 {offsets = [0, 96], sizes = [2, 32], strides = [1, 1]} : vector<2x128xf32> to vector<2x32xf32>
    %75 = arith.mulf %72, %51 : vector<2x32xf32>
    %76 = arith.mulf %71, %73 : vector<2x32xf32>
    %77 = arith.addf %75, %76 : vector<2x32xf32>
    %78 = math.tanh %77 : vector<2x32xf32>
    %79 = arith.mulf %74, %78 : vector<2x32xf32>
    %80 = arith.index_cast %c2_i32 : i32 to index
    %c0_22 = arith.constant 0 : index
    %c0_23 = arith.constant 0 : index
    %81 = vector.load %arg3[%80, %c0_22, %c0_23] : memref<8x2x32xf32, #tpu.memory_space<vmem>>, vector<1x2x32xf32>
    %82 = vector.shape_cast %81 : vector<1x2x32xf32> to vector<2x32xf32>
    %83 = vector.shape_cast %79 : vector<2x32xf32> to vector<1x2x32xf32>
    tpu.vector_store %arg3[%80, %c0_22, %c0_23], %83 {strides = array<i32>} : memref<8x2x32xf32, #tpu.memory_space<vmem>>, vector<1x2x32xf32>,
    %c3_i32 = arith.constant 3 : i32
    %84 = arith.index_cast %c3_i32 : i32 to index
    %c0_24 = arith.constant 0 : index
    %c0_25 = arith.constant 0 : index
    %85 = vector.load %arg0[%84, %c0_24, %c0_25] : memref<8x2x16xf32, #tpu.memory_space<vmem>>, vector<1x2x16xf32>
    %86 = vector.shape_cast %85 : vector<1x2x16xf32> to vector<2x16xf32>
    %87 = tpu.concatenate %86, %79 in 1 : vector<2x16xf32>, vector<2x32xf32> -> vector<2x48xf32>
    %cst_26 = arith.constant dense<0.000000e+00> : vector<2x128xf32>
    %88 = tpu.matmul %87, %0, %cst_26 {dimension_numbers = #tpu.dot_dimension_numbers<[1], [0], [0], [1], [0, 0, 1, 1], [], []>} : vector<2x48xf32>, vector<48x128xf32>, vector<2x128xf32> -> vector<2x128xf32>
    %89 = vector.broadcast %1 : vector<1x128xf32> to vector<2x128xf32>
    %90 = arith.addf %88, %89 : vector<2x128xf32>
    %91 = arith.negf %90 : vector<2x128xf32>
    %92 = math.exp %91 : vector<2x128xf32>
    %cst_27 = arith.constant 1.000000e+00 : f32
    %93 = vector.broadcast %cst_27 : f32 to vector<2x128xf32>
    %94 = arith.addf %93, %92 : vector<2x128xf32>
    %95 = arith.divf %93, %94 : vector<2x128xf32>
    %96 = math.tanh %90 : vector<2x128xf32>
    %97 = vector.extract_strided_slice %95 {offsets = [0, 0], sizes = [2, 32], strides = [1, 1]} : vector<2x128xf32> to vector<2x32xf32>
    %98 = vector.extract_strided_slice %95 {offsets = [0, 32], sizes = [2, 32], strides = [1, 1]} : vector<2x128xf32> to vector<2x32xf32>
    %99 = vector.extract_strided_slice %96 {offsets = [0, 64], sizes = [2, 32], strides = [1, 1]} : vector<2x128xf32> to vector<2x32xf32>
    %100 = vector.extract_strided_slice %95 {offsets = [0, 96], sizes = [2, 32], strides = [1, 1]} : vector<2x128xf32> to vector<2x32xf32>
    %101 = arith.mulf %98, %77 : vector<2x32xf32>
    %102 = arith.mulf %97, %99 : vector<2x32xf32>
    %103 = arith.addf %101, %102 : vector<2x32xf32>
    %104 = math.tanh %103 : vector<2x32xf32>
    %105 = arith.mulf %100, %104 : vector<2x32xf32>
    %106 = arith.index_cast %c3_i32 : i32 to index
    %c0_28 = arith.constant 0 : index
    %c0_29 = arith.constant 0 : index
    %107 = vector.load %arg3[%106, %c0_28, %c0_29] : memref<8x2x32xf32, #tpu.memory_space<vmem>>, vector<1x2x32xf32>
    %108 = vector.shape_cast %107 : vector<1x2x32xf32> to vector<2x32xf32>
    %109 = vector.shape_cast %105 : vector<2x32xf32> to vector<1x2x32xf32>
    tpu.vector_store %arg3[%106, %c0_28, %c0_29], %109 {strides = array<i32>} : memref<8x2x32xf32, #tpu.memory_space<vmem>>, vector<1x2x32xf32>,
    %c4_i32 = arith.constant 4 : i32
    %110 = arith.index_cast %c4_i32 : i32 to index
    %c0_30 = arith.constant 0 : index
    %c0_31 = arith.constant 0 : index
    %111 = vector.load %arg0[%110, %c0_30, %c0_31] : memref<8x2x16xf32, #tpu.memory_space<vmem>>, vector<1x2x16xf32>
    %112 = vector.shape_cast %111 : vector<1x2x16xf32> to vector<2x16xf32>
    %113 = tpu.concatenate %112, %105 in 1 : vector<2x16xf32>, vector<2x32xf32> -> vector<2x48xf32>
    %cst_32 = arith.constant dense<0.000000e+00> : vector<2x128xf32>
    %114 = tpu.matmul %113, %0, %cst_32 {dimension_numbers = #tpu.dot_dimension_numbers<[1], [0], [0], [1], [0, 0, 1, 1], [], []>} : vector<2x48xf32>, vector<48x128xf32>, vector<2x128xf32> -> vector<2x128xf32>
    %115 = vector.broadcast %1 : vector<1x128xf32> to vector<2x128xf32>
    %116 = arith.addf %114, %115 : vector<2x128xf32>
    %117 = arith.negf %116 : vector<2x128xf32>
    %118 = math.exp %117 : vector<2x128xf32>
    %cst_33 = arith.constant 1.000000e+00 : f32
    %119 = vector.broadcast %cst_33 : f32 to vector<2x128xf32>
    %120 = arith.addf %119, %118 : vector<2x128xf32>
    %121 = arith.divf %119, %120 : vector<2x128xf32>
    %122 = math.tanh %116 : vector<2x128xf32>
    %123 = vector.extract_strided_slice %121 {offsets = [0, 0], sizes = [2, 32], strides = [1, 1]} : vector<2x128xf32> to vector<2x32xf32>
    %124 = vector.extract_strided_slice %121 {offsets = [0, 32], sizes = [2, 32], strides = [1, 1]} : vector<2x128xf32> to vector<2x32xf32>
    %125 = vector.extract_strided_slice %122 {offsets = [0, 64], sizes = [2, 32], strides = [1, 1]} : vector<2x128xf32> to vector<2x32xf32>
    %126 = vector.extract_strided_slice %121 {offsets = [0, 96], sizes = [2, 32], strides = [1, 1]} : vector<2x128xf32> to vector<2x32xf32>
    %127 = arith.mulf %124, %103 : vector<2x32xf32>
    %128 = arith.mulf %123, %125 : vector<2x32xf32>
    %129 = arith.addf %127, %128 : vector<2x32xf32>
    %130 = math.tanh %129 : vector<2x32xf32>
    %131 = arith.mulf %126, %130 : vector<2x32xf32>
    %132 = arith.index_cast %c4_i32 : i32 to index
    %c0_34 = arith.constant 0 : index
    %c0_35 = arith.constant 0 : index
    %133 = vector.load %arg3[%132, %c0_34, %c0_35] : memref<8x2x32xf32, #tpu.memory_space<vmem>>, vector<1x2x32xf32>
    %134 = vector.shape_cast %133 : vector<1x2x32xf32> to vector<2x32xf32>
    %135 = vector.shape_cast %131 : vector<2x32xf32> to vector<1x2x32xf32>
    tpu.vector_store %arg3[%132, %c0_34, %c0_35], %135 {strides = array<i32>} : memref<8x2x32xf32, #tpu.memory_space<vmem>>, vector<1x2x32xf32>,
    %c5_i32 = arith.constant 5 : i32
    %136 = arith.index_cast %c5_i32 : i32 to index
    %c0_36 = arith.constant 0 : index
    %c0_37 = arith.constant 0 : index
    %137 = vector.load %arg0[%136, %c0_36, %c0_37] : memref<8x2x16xf32, #tpu.memory_space<vmem>>, vector<1x2x16xf32>
    %138 = vector.shape_cast %137 : vector<1x2x16xf32> to vector<2x16xf32>
    %139 = tpu.concatenate %138, %131 in 1 : vector<2x16xf32>, vector<2x32xf32> -> vector<2x48xf32>
    %cst_38 = arith.constant dense<0.000000e+00> : vector<2x128xf32>
    %140 = tpu.matmul %139, %0, %cst_38 {dimension_numbers = #tpu.dot_dimension_numbers<[1], [0], [0], [1], [0, 0, 1, 1], [], []>} : vector<2x48xf32>, vector<48x128xf32>, vector<2x128xf32> -> vector<2x128xf32>
    %141 = vector.broadcast %1 : vector<1x128xf32> to vector<2x128xf32>
    %142 = arith.addf %140, %141 : vector<2x128xf32>
    %143 = arith.negf %142 : vector<2x128xf32>
    %144 = math.exp %143 : vector<2x128xf32>
    %cst_39 = arith.constant 1.000000e+00 : f32
    %145 = vector.broadcast %cst_39 : f32 to vector<2x128xf32>
    %146 = arith.addf %145, %144 : vector<2x128xf32>
    %147 = arith.divf %145, %146 : vector<2x128xf32>
    %148 = math.tanh %142 : vector<2x128xf32>
    %149 = vector.extract_strided_slice %147 {offsets = [0, 0], sizes = [2, 32], strides = [1, 1]} : vector<2x128xf32> to vector<2x32xf32>
    %150 = vector.extract_strided_slice %147 {offsets = [0, 32], sizes = [2, 32], strides = [1, 1]} : vector<2x128xf32> to vector<2x32xf32>
    %151 = vector.extract_strided_slice %148 {offsets = [0, 64], sizes = [2, 32], strides = [1, 1]} : vector<2x128xf32> to vector<2x32xf32>
    %152 = vector.extract_strided_slice %147 {offsets = [0, 96], sizes = [2, 32], strides = [1, 1]} : vector<2x128xf32> to vector<2x32xf32>
    %153 = arith.mulf %150, %129 : vector<2x32xf32>
    %154 = arith.mulf %149, %151 : vector<2x32xf32>
    %155 = arith.addf %153, %154 : vector<2x32xf32>
    %156 = math.tanh %155 : vector<2x32xf32>
    %157 = arith.mulf %152, %156 : vector<2x32xf32>
    %158 = arith.index_cast %c5_i32 : i32 to index
    %c0_40 = arith.constant 0 : index
    %c0_41 = arith.constant 0 : index
    %159 = vector.load %arg3[%158, %c0_40, %c0_41] : memref<8x2x32xf32, #tpu.memory_space<vmem>>, vector<1x2x32xf32>
    %160 = vector.shape_cast %159 : vector<1x2x32xf32> to vector<2x32xf32>
    %161 = vector.shape_cast %157 : vector<2x32xf32> to vector<1x2x32xf32>
    tpu.vector_store %arg3[%158, %c0_40, %c0_41], %161 {strides = array<i32>} : memref<8x2x32xf32, #tpu.memory_space<vmem>>, vector<1x2x32xf32>,
    %c6_i32 = arith.constant 6 : i32
    %162 = arith.index_cast %c6_i32 : i32 to index
    %c0_42 = arith.constant 0 : index
    %c0_43 = arith.constant 0 : index
    %163 = vector.load %arg0[%162, %c0_42, %c0_43] : memref<8x2x16xf32, #tpu.memory_space<vmem>>, vector<1x2x16xf32>
    %164 = vector.shape_cast %163 : vector<1x2x16xf32> to vector<2x16xf32>
    %165 = tpu.concatenate %164, %157 in 1 : vector<2x16xf32>, vector<2x32xf32> -> vector<2x48xf32>
    %cst_44 = arith.constant dense<0.000000e+00> : vector<2x128xf32>
    %166 = tpu.matmul %165, %0, %cst_44 {dimension_numbers = #tpu.dot_dimension_numbers<[1], [0], [0], [1], [0, 0, 1, 1], [], []>} : vector<2x48xf32>, vector<48x128xf32>, vector<2x128xf32> -> vector<2x128xf32>
    %167 = vector.broadcast %1 : vector<1x128xf32> to vector<2x128xf32>
    %168 = arith.addf %166, %167 : vector<2x128xf32>
    %169 = arith.negf %168 : vector<2x128xf32>
    %170 = math.exp %169 : vector<2x128xf32>
    %cst_45 = arith.constant 1.000000e+00 : f32
    %171 = vector.broadcast %cst_45 : f32 to vector<2x128xf32>
    %172 = arith.addf %171, %170 : vector<2x128xf32>
    %173 = arith.divf %171, %172 : vector<2x128xf32>
    %174 = math.tanh %168 : vector<2x128xf32>
    %175 = vector.extract_strided_slice %173 {offsets = [0, 0], sizes = [2, 32], strides = [1, 1]} : vector<2x128xf32> to vector<2x32xf32>
    %176 = vector.extract_strided_slice %173 {offsets = [0, 32], sizes = [2, 32], strides = [1, 1]} : vector<2x128xf32> to vector<2x32xf32>
    %177 = vector.extract_strided_slice %174 {offsets = [0, 64], sizes = [2, 32], strides = [1, 1]} : vector<2x128xf32> to vector<2x32xf32>
    %178 = vector.extract_strided_slice %173 {offsets = [0, 96], sizes = [2, 32], strides = [1, 1]} : vector<2x128xf32> to vector<2x32xf32>
    %179 = arith.mulf %176, %155 : vector<2x32xf32>
    %180 = arith.mulf %175, %177 : vector<2x32xf32>
    %181 = arith.addf %179, %180 : vector<2x32xf32>
    %182 = math.tanh %181 : vector<2x32xf32>
    %183 = arith.mulf %178, %182 : vector<2x32xf32>
    %184 = arith.index_cast %c6_i32 : i32 to index
    %c0_46 = arith.constant 0 : index
    %c0_47 = arith.constant 0 : index
    %185 = vector.load %arg3[%184, %c0_46, %c0_47] : memref<8x2x32xf32, #tpu.memory_space<vmem>>, vector<1x2x32xf32>
    %186 = vector.shape_cast %185 : vector<1x2x32xf32> to vector<2x32xf32>
    %187 = vector.shape_cast %183 : vector<2x32xf32> to vector<1x2x32xf32>
    tpu.vector_store %arg3[%184, %c0_46, %c0_47], %187 {strides = array<i32>} : memref<8x2x32xf32, #tpu.memory_space<vmem>>, vector<1x2x32xf32>,
    %c7_i32 = arith.constant 7 : i32
    %188 = arith.index_cast %c7_i32 : i32 to index
    %c0_48 = arith.constant 0 : index
    %c0_49 = arith.constant 0 : index
    %189 = vector.load %arg0[%188, %c0_48, %c0_49] : memref<8x2x16xf32, #tpu.memory_space<vmem>>, vector<1x2x16xf32>
    %190 = vector.shape_cast %189 : vector<1x2x16xf32> to vector<2x16xf32>
    %191 = tpu.concatenate %190, %183 in 1 : vector<2x16xf32>, vector<2x32xf32> -> vector<2x48xf32>
    %cst_50 = arith.constant dense<0.000000e+00> : vector<2x128xf32>
    %192 = tpu.matmul %191, %0, %cst_50 {dimension_numbers = #tpu.dot_dimension_numbers<[1], [0], [0], [1], [0, 0, 1, 1], [], []>} : vector<2x48xf32>, vector<48x128xf32>, vector<2x128xf32> -> vector<2x128xf32>
    %193 = vector.broadcast %1 : vector<1x128xf32> to vector<2x128xf32>
    %194 = arith.addf %192, %193 : vector<2x128xf32>
    %195 = arith.negf %194 : vector<2x128xf32>
    %196 = math.exp %195 : vector<2x128xf32>
    %cst_51 = arith.constant 1.000000e+00 : f32
    %197 = vector.broadcast %cst_51 : f32 to vector<2x128xf32>
    %198 = arith.addf %197, %196 : vector<2x128xf32>
    %199 = arith.divf %197, %198 : vector<2x128xf32>
    %200 = math.tanh %194 : vector<2x128xf32>
    %201 = vector.extract_strided_slice %199 {offsets = [0, 0], sizes = [2, 32], strides = [1, 1]} : vector<2x128xf32> to vector<2x32xf32>
    %202 = vector.extract_strided_slice %199 {offsets = [0, 32], sizes = [2, 32], strides = [1, 1]} : vector<2x128xf32> to vector<2x32xf32>
    %203 = vector.extract_strided_slice %200 {offsets = [0, 64], sizes = [2, 32], strides = [1, 1]} : vector<2x128xf32> to vector<2x32xf32>
    %204 = vector.extract_strided_slice %199 {offsets = [0, 96], sizes = [2, 32], strides = [1, 1]} : vector<2x128xf32> to vector<2x32xf32>
    %205 = arith.mulf %202, %181 : vector<2x32xf32>
    %206 = arith.mulf %201, %203 : vector<2x32xf32>
    %207 = arith.addf %205, %206 : vector<2x32xf32>
    %208 = math.tanh %207 : vector<2x32xf32>
    %209 = arith.mulf %204, %208 : vector<2x32xf32>
    %210 = arith.index_cast %c7_i32 : i32 to index
    %c0_52 = arith.constant 0 : index
    %c0_53 = arith.constant 0 : index
    %211 = vector.load %arg3[%210, %c0_52, %c0_53] : memref<8x2x32xf32, #tpu.memory_space<vmem>>, vector<1x2x32xf32>
    %212 = vector.shape_cast %211 : vector<1x2x32xf32> to vector<2x32xf32>
    %213 = vector.shape_cast %209 : vector<2x32xf32> to vector<1x2x32xf32>
    tpu.vector_store %arg3[%210, %c0_52, %c0_53], %213 {strides = array<i32>} : memref<8x2x32xf32, #tpu.memory_space<vmem>>, vector<1x2x32xf32>,
    %c8_i32 = arith.constant 8 : i32
    %c0_54 = arith.constant 0 : index
    %c0_55 = arith.constant 0 : index
    %c0_56 = arith.constant 0 : index
    %214 = vector.load %arg4[%c0_54, %c0_55, %c0_56] : memref<2x2x32xf32, #tpu.memory_space<vmem>>, vector<1x2x32xf32>
    %215 = vector.shape_cast %214 : vector<1x2x32xf32> to vector<2x32xf32>
    %216 = vector.shape_cast %209 : vector<2x32xf32> to vector<1x2x32xf32>
    tpu.vector_store %arg4[%c0_54, %c0_55, %c0_56], %216 {strides = array<i32>} : memref<2x2x32xf32, #tpu.memory_space<vmem>>, vector<1x2x32xf32>,
    %c1_57 = arith.constant 1 : index
    %c0_58 = arith.constant 0 : index
    %c0_59 = arith.constant 0 : index
    %217 = vector.load %arg4[%c1_57, %c0_58, %c0_59] : memref<2x2x32xf32, #tpu.memory_space<vmem>>, vector<1x2x32xf32>
    %218 = vector.shape_cast %217 : vector<1x2x32xf32> to vector<2x32xf32>
    %219 = vector.shape_cast %207 : vector<2x32xf32> to vector<1x2x32xf32>
    tpu.vector_store %arg4[%c1_57, %c0_58, %c0_59], %219 {strides = array<i32>} : memref<2x2x32xf32, #tpu.memory_space<vmem>>, vector<1x2x32xf32>,
    return
  }
}

</mosaic_0001>

<llo_original>
// kernel: encoder_forward.1
$region0: #{encoder_forward.1}
  #allocation0 [shape = 'u32[]', space=smem, size = 0x4, offset = 0x4, fixed_abs, tag = 'smem constant byte address 0x4 - core index']
  #allocation1 [shape = 'u32[144,128]{1,0:T(1,128)}', space=vmem, size = 0x12000, scoped, tag = 'internal scratch']
  %s0 = inlined_call_operand.vmem [shape: f32[8,2,16], index: 0, kind: input, shape index: {}]
  %s1 = inlined_call_operand.vmem [shape: f32[2,2,32], index: 1, kind: input, shape index: {}]
  %s2 = inlined_call_operand.hbm [shape: f32[49,128], index: 2, kind: input, shape index: {}]
  %s3 = inlined_call_operand.vmem [shape: f32[8,2,32], index: 3, kind: output, shape index: {0}]
  %s4 = inlined_call_operand.vmem [shape: f32[2,2,32], index: 4, kind: output, shape index: {1}]
  %5 = xla_tuple %s3, %s4
  %s6 = sld [smem:[#allocation0]]
  $region34: #{encoder_forward.1} parent=0
    _
  %s8 = ssub.s32 1, %s6
  %s9 = scalar_select 0, %s8, %s6
  $region1: #{encoder_forward.1} parent=0
    #allocation2 [shape = 'u8[28672]{0}', space=vmem, size = 0x7000, scoped, tag = 'input window, operand 2, single buffered']
    #allocation3 [shape = 's32[1]{0}', space=sflag, size = 0x4, scoped, tag = 'scoped memory for encoder_forward.1']
    %10 = vsyncpa [#allocation3], 0
    // Predicated region
    $region2: #{encoder_forward.1} parent=1 // pred_check
      _
    $region3: #{encoder_forward.1} parent=1 // pred_check_branch
      %12 = sbr.rel (0) target = $region5
    $region4: #{encoder_forward.1} parent=1 // pred_region
      _
    $region5: #{encoder_forward.1} parent=1 // pred_fallthru
      _
    // Predicated region
    $region6: #{encoder_forward.1} parent=1 // pred_check
      _
    $region7: #{encoder_forward.1} parent=1 // pred_check_branch
      %14 = sbr.rel (0) target = $region9
    $region8: #{encoder_forward.1} parent=1 // pred_region
      _
    $region9: #{encoder_forward.1} parent=1 // pred_fallthru
      _
    // Predicated region
    $region10: #{encoder_forward.1} parent=1 // pred_check
      _
    $region11: #{encoder_forward.1} parent=1 // pred_check_branch
      %16 = sbr.rel (0) target = $region13
    $region12: #{encoder_forward.1} parent=1 // pred_region
      %s18 = ssub.s32 896, 896
      %19 = vsyncadd [#allocation3], %s18
      %s20 = sshll.u32 [#allocation2], 4
      %s21 = int_to_ptr.vmem [resolvable:$true] %s20
      %26 = dma.hbm_to_vmem [thread:$0]  %s2, 896, %s21, [#allocation3], 128, 128, 8
    $region13: #{encoder_forward.1} parent=1 // pred_fallthru
      _
    // Predicated region
    $region14: #{encoder_forward.1} parent=1 // pred_check
      _
    $region15: #{encoder_forward.1} parent=1 // pred_check_branch
      %28 = sbr.rel (0) target = $region17
    $region16: #{encoder_forward.1} parent=1 // pred_region
      %29 = dma.done [#allocation3], 896
    $region17: #{encoder_forward.1} parent=1 // pred_fallthru
      _
    %v30 = vld [vmem:[#allocation2] sm:$0xff]
    %v31 = vld [vmem:[#allocation2 + $0x8] sm:$0xff]
    %v32 = vld [vmem:[#allocation2 + $0x10] sm:$0xff]
    %v33 = vld [vmem:[#allocation2 + $0x18] sm:$0xff]
    %v34 = vld [vmem:[#allocation2 + $0x20] sm:$0xff]
    %v35 = vld [vmem:[#allocation2 + $0x28] sm:$0xff]
    %v36 = vld [vmem:[#allocation2 + $0x30] sm:$0x1]
    %v37 = vld [vmem:[%s1] sm:$0x3]
    %s38 = scalar_lea.vmem %s1, 2
    %v39 = vld [vmem:[%s38] sm:$0x3]
    %v40 = vld [vmem:[%s0] sm:$0x3]
    %42 = vrot.lane.b32.xlu0 %v37, 16
    %v43 = vpop.permute.xlu0 %42
    %vm45 = vcmask 130048
    %v46 = vsel %vm45, %v40, %v43
    %v47 = vlaneseq
    %v48 = vshrl.u32 %v47, 7
    %v49 = vsub.s32 0, %v48
    %v50 = vrot.slane %v36, %v49
    %vm51 = vcmask 392192
    %v53 = vsel %vm51, %v46, 0
    %55 = vmatprep.subr.mxu0 0.0
    %56 = vmatpush1.msra.mxu0 %v30
    %57 = vmatprep.subr.mxu0 0.0
    %58 = vmatpush1.msra.mxu0 %v31
    %59 = vmatprep.subr.mxu0 0.0
    %60 = vmatpush1.msra.mxu0 %v32
    %61 = vmatprep.subr.mxu0 0.0
    %62 = vmatpush1.msra.mxu0 %v33
    %63 = vmatprep.subr.mxu0 0.0
    %64 = vmatpush1.msra.mxu0 %v34
    %65 = vmatprep.subr.mxu0 0.0
    %66 = vmatpush1.msra.mxu0 %v35
    %67 = vmatprep.subr.mxu0 0.0
    %68 = vmatpush1.msra.mxu0 0.0
    %69 = vmatprep.subr.mxu0 0.0
    %70 = vmatpush1.msra.mxu0 0.0
    %71 = vmatprep.subr.mxu0 0.0
    %72 = vmatpush1.msra.mxu0 0.0
    %73 = vmatprep.subr.mxu0 0.0
    %74 = vmatpush1.msra.mxu0 0.0
    %75 = vmatprep.subr.mxu0 0.0
    %76 = vmatpush1.msra.mxu0 0.0
    %77 = vmatprep.subr.mxu0 0.0
    %78 = vmatpush1.msra.mxu0 0.0
    %79 = vmatprep.subr.mxu0 0.0
    %80 = vmatpush1.msra.mxu0 0.0
    %81 = vmatprep.subr.mxu0 0.0
    %82 = vmatpush1.msra.mxu0 0.0
    %83 = vmatprep.subr.mxu0 0.0
    %84 = vmatpush1.msra.mxu0 0.0
    %85 = vmatprep.subr.mxu0 0.0
    %86 = vmatpush1.msra.mxu0 0.0
    %87 = vmatprep.subr.mxu0 0.0
    %88 = vmatpush1.msra.mxu0 0.0
    %89 = vmatprep.subr.mxu0 0.0
    %90 = vmatpush1.msra.mxu0 0.0
    %91 = vmatprep.subr.mxu0 0.0
    %92 = vmatpush1.msra.mxu0 0.0
    %93 = vmatprep.subr.mxu0 0.0
    %94 = vmatpush1.msra.mxu0 0.0
    %95 = vmatprep.subr.mxu0 0.0
    %96 = vmatpush1.msra.mxu0 0.0
    %97 = vmatprep.subr.mxu0 0.0
    %98 = vmatpush1.msra.mxu0 0.0
    %99 = vmatprep.subr.mxu0 0.0
    %100 = vmatpush1.msra.mxu0 0.0
    %101 = vmatprep.subr.mxu0 0.0
    %102 = vmatpush1.msra.mxu0 0.0
    %103 = vmatprep.subr.mxu0 0.0
    %104 = vmatpush1.msra.mxu0 0.0
    %105 = vmatprep.subr.mxu0 0.0
    %106 = vmatpush1.msra.mxu0 0.0
    %107 = vmatprep.subr.mxu0 0.0
    %108 = vmatpush1.msra.mxu0 0.0
    %109 = vmatprep.subr.mxu0 0.0
    %110 = vmatpush1.msra.mxu0 0.0
    %111 = vmatprep.subr.mxu0 0.0
    %112 = vmatpush1.msra.mxu0 0.0
    %113 = vmatprep.subr.mxu0 0.0
    %114 = vmatpush1.msra.mxu0 0.0
    %115 = vmatprep.subr.mxu0 0.0
    %116 = vmatpush1.msra.mxu0 0.0
    %117 = vmatprep.subr.mxu0 0.0
    %118 = vmatpush1.msra.mxu0 0.0
    %119 = vmatprep.mubr.f32.mxu0 0.0
    %120 = vmatmul.mubr.f32.gmra.mrb[0].mxu0 %v53
    %v121 = vpop.f32.mrb[0].mxu0
    %v122 = vadd.f32 %v50, %v121
    %v123 = vpop.f32.mrb[0].mxu0
    %124 = vdwg.mxu0
    %v125 = vxor.u32 %v122, 2147483648
    %v126 = vmul.f32 %v125, 1.442695
    %v127 = vpow.pop %v126
    %v128 = vadd.f32 %v127, 1.0
    %v129 = vrcp.pop %v128
    %v130 = vmul.f32 1.0, %v129
    %v131 = vtanh.pop %v122
    %133 = vrot.lane.b32.xlu0 %v39, 32
    %v134 = vpop.permute.xlu0 %133
    %v136 = vmul.f32 %v130, %v134
    %138 = vrot.lane.b32.xlu0 %v131, 64
    %v139 = vpop.permute.xlu0 %138
    %v141 = vmul.f32 %v130, %v139
    %143 = vrot.lane.b32.xlu0 %v141, 32
    %v144 = vpop.permute.xlu0 %143
    %v146 = vadd.f32 %v136, %v144
    %v147 = vtanh.pop %v146
    %149 = vrot.lane.b32.xlu0 %v147, 64
    %v150 = vpop.permute.xlu0 %149
    %v152 = vmul.f32 %v130, %v150
    %154 = vrot.lane.b32.xlu0 %v152, 32
    %v155 = vpop.permute.xlu0 %154
    %vm157 = vcmask 254976
    %158 = vst.msk [vmem:[%s3] sm:$0x3] %vm157, %v155
    %s159 = scalar_lea.vmem %s0, 2
    %v160 = vld [vmem:[%s159] sm:$0x3]
    %161 = vrot.lane.b32.xlu0 %v152, 48
    %v162 = vpop.permute.xlu0 %161
    %v164 = vsel %vm45, %v160, %v162
    %v166 = vsel %vm51, %v164, 0
    %168 = vmatprep.subr.mxu0 0.0
    %169 = vmatpush1.msra.mxu0 %v30
    %170 = vmatprep.subr.mxu0 0.0
    %171 = vmatpush1.msra.mxu0 %v31
    %172 = vmatprep.subr.mxu0 0.0
    %173 = vmatpush1.msra.mxu0 %v32
    %174 = vmatprep.subr.mxu0 0.0
    %175 = vmatpush1.msra.mxu0 %v33
    %176 = vmatprep.subr.mxu0 0.0
    %177 = vmatpush1.msra.mxu0 %v34
    %178 = vmatprep.subr.mxu0 0.0
    %179 = vmatpush1.msra.mxu0 %v35
    %180 = vmatprep.subr.mxu0 0.0
    %181 = vmatpush1.msra.mxu0 0.0
    %182 = vmatprep.subr.mxu0 0.0
    %183 = vmatpush1.msra.mxu0 0.0
    %184 = vmatprep.subr.mxu0 0.0
    %185 = vmatpush1.msra.mxu0 0.0
    %186 = vmatprep.subr.mxu0 0.0
    %187 = vmatpush1.msra.mxu0 0.0
    %188 = vmatprep.subr.mxu0 0.0
    %189 = vmatpush1.msra.mxu0 0.0
    %190 = vmatprep.subr.mxu0 0.0
    %191 = vmatpush1.msra.mxu0 0.0
    %192 = vmatprep.subr.mxu0 0.0
    %193 = vmatpush1.msra.mxu0 0.0
    %194 = vmatprep.subr.mxu0 0.0
    %195 = vmatpush1.msra.mxu0 0.0
    %196 = vmatprep.subr.mxu0 0.0
    %197 = vmatpush1.msra.mxu0 0.0
    %198 = vmatprep.subr.mxu0 0.0
    %199 = vmatpush1.msra.mxu0 0.0
    %200 = vmatprep.subr.mxu0 0.0
    %201 = vmatpush1.msra.mxu0 0.0
    %202 = vmatprep.subr.mxu0 0.0
    %203 = vmatpush1.msra.mxu0 0.0
    %204 = vmatprep.subr.mxu0 0.0
    %205 = vmatpush1.msra.mxu0 0.0
    %206 = vmatprep.subr.mxu0 0.0
    %207 = vmatpush1.msra.mxu0 0.0
    %208 = vmatprep.subr.mxu0 0.0
    %209 = vmatpush1.msra.mxu0 0.0
    %210 = vmatprep.subr.mxu0 0.0
    %211 = vmatpush1.msra.mxu0 0.0
    %212 = vmatprep.subr.mxu0 0.0
    %213 = vmatpush1.msra.mxu0 0.0
    %214 = vmatprep.subr.mxu0 0.0
    %215 = vmatpush1.msra.mxu0 0.0
    %216 = vmatprep.subr.mxu0 0.0
    %217 = vmatpush1.msra.mxu0 0.0
    %218 = vmatprep.subr.mxu0 0.0
    %219 = vmatpush1.msra.mxu0 0.0
    %220 = vmatprep.subr.mxu0 0.0
    %221 = vmatpush1.msra.mxu0 0.0
    %222 = vmatprep.subr.mxu0 0.0
    %223 = vmatpush1.msra.mxu0 0.0
    %224 = vmatprep.subr.mxu0 0.0
    %225 = vmatpush1.msra.mxu0 0.0
    %226 = vmatprep.subr.mxu0 0.0
    %227 = vmatpush1.msra.mxu0 0.0
    %228 = vmatprep.subr.mxu0 0.0
    %229 = vmatpush1.msra.mxu0 0.0
    %230 = vmatprep.subr.mxu0 0.0
    %231 = vmatpush1.msra.mxu0 0.0
    %232 = vmatprep.mubr.f32.mxu0 0.0
    %233 = vmatmul.mubr.f32.gmra.mrb[0].mxu0 %v166
    %v234 = vpop.f32.mrb[0].mxu0
    %v235 = vadd.f32 %v50, %v234
    %v236 = vpop.f32.mrb[0].mxu0
    %237 = vdwg.mxu0
    %v238 = vxor.u32 %v235, 2147483648
    %v239 = vmul.f32 %v238, 1.442695
    %v240 = vpow.pop %v239
    %v241 = vadd.f32 %v240, 1.0
    %v242 = vrcp.pop %v241
    %v243 = vmul.f32 1.0, %v242
    %v244 = vtanh.pop %v235
    %v245 = vmul.f32 %v243, %v146
    %247 = vrot.lane.b32.xlu0 %v244, 64
    %v248 = vpop.permute.xlu0 %247
    %v250 = vmul.f32 %v243, %v248
    %252 = vrot.lane.b32.xlu0 %v250, 32
    %v253 = vpop.permute.xlu0 %252
    %v255 = vadd.f32 %v245, %v253
    %v256 = vtanh.pop %v255
    %258 = vrot.lane.b32.xlu0 %v256, 64
    %v259 = vpop.permute.xlu0 %258
    %v261 = vmul.f32 %v243, %v259
    %263 = vrot.lane.b32.xlu0 %v261, 32
    %v264 = vpop.permute.xlu0 %263
    %s266 = scalar_lea.vmem %s3, 2
    %267 = vst.msk [vmem:[%s266] sm:$0x3] %vm157, %v264
    %s268 = scalar_lea.vmem %s0, 4
    %v269 = vld [vmem:[%s268] sm:$0x3]
    %270 = vrot.lane.b32.xlu0 %v261, 48
    %v271 = vpop.permute.xlu0 %270
    %v273 = vsel %vm45, %v269, %v271
    %v275 = vsel %vm51, %v273, 0
    %277 = vmatprep.subr.mxu0 0.0
    %278 = vmatpush1.msra.mxu0 %v30
    %279 = vmatprep.subr.mxu0 0.0
    %280 = vmatpush1.msra.mxu0 %v31
    %281 = vmatprep.subr.mxu0 0.0
    %282 = vmatpush1.msra.mxu0 %v32
    %283 = vmatprep.subr.mxu0 0.0
    %284 = vmatpush1.msra.mxu0 %v33
    %285 = vmatprep.subr.mxu0 0.0
    %286 = vmatpush1.msra.mxu0 %v34
    %287 = vmatprep.subr.mxu0 0.0
    %288 = vmatpush1.msra.mxu0 %v35
    %289 = vmatprep.subr.mxu0 0.0
    %290 = vmatpush1.msra.mxu0 0.0
    %291 = vmatprep.subr.mxu0 0.0
    %292 = vmatpush1.msra.mxu0 0.0
    %293 = vmatprep.subr.mxu0 0.0
    %294 = vmatpush1.msra.mxu0 0.0
    %295 = vmatprep.subr.mxu0 0.0
    %296 = vmatpush1.msra.mxu0 0.0
    %297 = vmatprep.subr.mxu0 0.0
    %298 = vmatpush1.msra.mxu0 0.0
    %299 = vmatprep.subr.mxu0 0.0
    %300 = vmatpush1.msra.mxu0 0.0
    %301 = vmatprep.subr.mxu0 0.0
    %302 = vmatpush1.msra.mxu0 0.0
    %303 = vmatprep.subr.mxu0 0.0
    %304 = vmatpush1.msra.mxu0 0.0
    %305 = vmatprep.subr.mxu0 0.0
    %306 = vmatpush1.msra.mxu0 0.0
    %307 = vmatprep.subr.mxu0 0.0
    %308 = vmatpush1.msra.mxu0 0.0
    %309 = vmatprep.subr.mxu0 0.0
    %310 = vmatpush1.msra.mxu0 0.0
    %311 = vmatprep.subr.mxu0 0.0
    %312 = vmatpush1.msra.mxu0 0.0
    %313 = vmatprep.subr.mxu0 0.0
    %314 = vmatpush1.msra.mxu0 0.0
    %315 = vmatprep.subr.mxu0 0.0
    %316 = vmatpush1.msra.mxu0 0.0
    %317 = vmatprep.subr.mxu0 0.0
    %318 = vmatpush1.msra.mxu0 0.0
    %319 = vmatprep.subr.mxu0 0.0
    %320 = vmatpush1.msra.mxu0 0.0
    %321 = vmatprep.subr.mxu0 0.0
    %322 = vmatpush1.msra.mxu0 0.0
    %323 = vmatprep.subr.mxu0 0.0
    %324 = vmatpush1.msra.mxu0 0.0
    %325 = vmatprep.subr.mxu0 0.0
    %326 = vmatpush1.msra.mxu0 0.0
    %327 = vmatprep.subr.mxu0 0.0
    %328 = vmatpush1.msra.mxu0 0.0
    %329 = vmatprep.subr.mxu0 0.0
    %330 = vmatpush1.msra.mxu0 0.0
    %331 = vmatprep.subr.mxu0 0.0
    %332 = vmatpush1.msra.mxu0 0.0
    %333 = vmatprep.subr.mxu0 0.0
    %334 = vmatpush1.msra.mxu0 0.0
    %335 = vmatprep.subr.mxu0 0.0
    %336 = vmatpush1.msra.mxu0 0.0
    %337 = vmatprep.subr.mxu0 0.0
    %338 = vmatpush1.msra.mxu0 0.0
    %339 = vmatprep.subr.mxu0 0.0
    %340 = vmatpush1.msra.mxu0 0.0
    %341 = vmatprep.mubr.f32.mxu0 0.0
    %342 = vmatmul.mubr.f32.gmra.mrb[0].mxu0 %v275
    %v343 = vpop.f32.mrb[0].mxu0
    %v344 = vadd.f32 %v50, %v343
    %v345 = vpop.f32.mrb[0].mxu0
    %346 = vdwg.mxu0
    %v347 = vxor.u32 %v344, 2147483648
    %v348 = vmul.f32 %v347, 1.442695
    %v349 = vpow.pop %v348
    %v350 = vadd.f32 %v349, 1.0
    %v351 = vrcp.pop %v350
    %v352 = vmul.f32 1.0, %v351
    %v353 = vtanh.pop %v344
    %v354 = vmul.f32 %v352, %v255
    %356 = vrot.lane.b32.xlu0 %v353, 64
    %v357 = vpop.permute.xlu0 %356
    %v359 = vmul.f32 %v352, %v357
    %361 = vrot.lane.b32.xlu0 %v359, 32
    %v362 = vpop.permute.xlu0 %361
    %v364 = vadd.f32 %v354, %v362
    %v365 = vtanh.pop %v364
    %367 = vrot.lane.b32.xlu0 %v365, 64
    %v368 = vpop.permute.xlu0 %367
    %v370 = vmul.f32 %v352, %v368
    %372 = vrot.lane.b32.xlu0 %v370, 32
    %v373 = vpop.permute.xlu0 %372
    %s375 = scalar_lea.vmem %s3, 4
    %376 = vst.msk [vmem:[%s375] sm:$0x3] %vm157, %v373
    %s377 = scalar_lea.vmem %s0, 6
    %v378 = vld [vmem:[%s377] sm:$0x3]
    %379 = vrot.lane.b32.xlu0 %v370, 48
    %v380 = vpop.permute.xlu0 %379
    %v382 = vsel %vm45, %v378, %v380
    %v384 = vsel %vm51, %v382, 0
    %386 = vmatprep.subr.mxu0 0.0
    %387 = vmatpush1.msra.mxu0 %v30
    %388 = vmatprep.subr.mxu0 0.0
    %389 = vmatpush1.msra.mxu0 %v31
    %390 = vmatprep.subr.mxu0 0.0
    %391 = vmatpush1.msra.mxu0 %v32
    %392 = vmatprep.subr.mxu0 0.0
    %393 = vmatpush1.msra.mxu0 %v33
    %394 = vmatprep.subr.mxu0 0.0
    %395 = vmatpush1.msra.mxu0 %v34
    %396 = vmatprep.subr.mxu0 0.0
    %397 = vmatpush1.msra.mxu0 %v35
    %398 = vmatprep.subr.mxu0 0.0
    %399 = vmatpush1.msra.mxu0 0.0
    %400 = vmatprep.subr.mxu0 0.0
    %401 = vmatpush1.msra.mxu0 0.0
    %402 = vmatprep.subr.mxu0 0.0
    %403 = vmatpush1.msra.mxu0 0.0
    %404 = vmatprep.subr.mxu0 0.0
    %405 = vmatpush1.msra.mxu0 0.0
    %406 = vmatprep.subr.mxu0 0.0
    %407 = vmatpush1.msra.mxu0 0.0
    %408 = vmatprep.subr.mxu0 0.0
    %409 = vmatpush1.msra.mxu0 0.0
    %410 = vmatprep.subr.mxu0 0.0
    %411 = vmatpush1.msra.mxu0 0.0
    %412 = vmatprep.subr.mxu0 0.0
    %413 = vmatpush1.msra.mxu0 0.0
    %414 = vmatprep.subr.mxu0 0.0
    %415 = vmatpush1.msra.mxu0 0.0
    %416 = vmatprep.subr.mxu0 0.0
    %417 = vmatpush1.msra.mxu0 0.0
    %418 = vmatprep.subr.mxu0 0.0
    %419 = vmatpush1.msra.mxu0 0.0
    %420 = vmatprep.subr.mxu0 0.0
    %421 = vmatpush1.msra.mxu0 0.0
    %422 = vmatprep.subr.mxu0 0.0
    %423 = vmatpush1.msra.mxu0 0.0
    %424 = vmatprep.subr.mxu0 0.0
    %425 = vmatpush1.msra.mxu0 0.0
    %426 = vmatprep.subr.mxu0 0.0
    %427 = vmatpush1.msra.mxu0 0.0
    %428 = vmatprep.subr.mxu0 0.0
    %429 = vmatpush1.msra.mxu0 0.0
    %430 = vmatprep.subr.mxu0 0.0
    %431 = vmatpush1.msra.mxu0 0.0
    %432 = vmatprep.subr.mxu0 0.0
    %433 = vmatpush1.msra.mxu0 0.0
    %434 = vmatprep.subr.mxu0 0.0
    %435 = vmatpush1.msra.mxu0 0.0
    %436 = vmatprep.subr.mxu0 0.0
    %437 = vmatpush1.msra.mxu0 0.0
    %438 = vmatprep.subr.mxu0 0.0
    %439 = vmatpush1.msra.mxu0 0.0
    %440 = vmatprep.subr.mxu0 0.0
    %441 = vmatpush1.msra.mxu0 0.0
    %442 = vmatprep.subr.mxu0 0.0
    %443 = vmatpush1.msra.mxu0 0.0
    %444 = vmatprep.subr.mxu0 0.0
    %445 = vmatpush1.msra.mxu0 0.0
    %446 = vmatprep.subr.mxu0 0.0
    %447 = vmatpush1.msra.mxu0 0.0
    %448 = vmatprep.subr.mxu0 0.0
    %449 = vmatpush1.msra.mxu0 0.0
    %450 = vmatprep.mubr.f32.mxu0 0.0
    %451 = vmatmul.mubr.f32.gmra.mrb[0].mxu0 %v384
    %v452 = vpop.f32.mrb[0].mxu0
    %v453 = vadd.f32 %v50, %v452
    %v454 = vpop.f32.mrb[0].mxu0
    %455 = vdwg.mxu0
    %v456 = vxor.u32 %v453, 2147483648
    %v457 = vmul.f32 %v456, 1.442695
    %v458 = vpow.pop %v457
    %v459 = vadd.f32 %v458, 1.0
    %v460 = vrcp.pop %v459
    %v461 = vmul.f32 1.0, %v460
    %v462 = vtanh.pop %v453
    %v463 = vmul.f32 %v461, %v364
    %465 = vrot.lane.b32.xlu0 %v462, 64
    %v466 = vpop.permute.xlu0 %465
    %v468 = vmul.f32 %v461, %v466
    %470 = vrot.lane.b32.xlu0 %v468, 32
    %v471 = vpop.permute.xlu0 %470
    %v473 = vadd.f32 %v463, %v471
    %v474 = vtanh.pop %v473
    %476 = vrot.lane.b32.xlu0 %v474, 64
    %v477 = vpop.permute.xlu0 %476
    %v479 = vmul.f32 %v461, %v477
    %481 = vrot.lane.b32.xlu0 %v479, 32
    %v482 = vpop.permute.xlu0 %481
    %s484 = scalar_lea.vmem %s3, 6
    %485 = vst.msk [vmem:[%s484] sm:$0x3] %vm157, %v482
    %s486 = scalar_lea.vmem %s0, 8
    %v487 = vld [vmem:[%s486] sm:$0x3]
    %488 = vrot.lane.b32.xlu0 %v479, 48
    %v489 = vpop.permute.xlu0 %488
    %v491 = vsel %vm45, %v487, %v489
    %v493 = vsel %vm51, %v491, 0
    %495 = vmatprep.subr.mxu0 0.0
    %496 = vmatpush1.msra.mxu0 %v30
    %497 = vmatprep.subr.mxu0 0.0
    %498 = vmatpush1.msra.mxu0 %v31
    %499 = vmatprep.subr.mxu0 0.0
    %500 = vmatpush1.msra.mxu0 %v32
    %501 = vmatprep.subr.mxu0 0.0
    %502 = vmatpush1.msra.mxu0 %v33
    %503 = vmatprep.subr.mxu0 0.0
    %504 = vmatpush1.msra.mxu0 %v34
    %505 = vmatprep.subr.mxu0 0.0
    %506 = vmatpush1.msra.mxu0 %v35
    %507 = vmatprep.subr.mxu0 0.0
    %508 = vmatpush1.msra.mxu0 0.0
    %509 = vmatprep.subr.mxu0 0.0
    %510 = vmatpush1.msra.mxu0 0.0
    %511 = vmatprep.subr.mxu0 0.0
    %512 = vmatpush1.msra.mxu0 0.0
    %513 = vmatprep.subr.mxu0 0.0
    %514 = vmatpush1.msra.mxu0 0.0
    %515 = vmatprep.subr.mxu0 0.0
    %516 = vmatpush1.msra.mxu0 0.0
    %517 = vmatprep.subr.mxu0 0.0
    %518 = vmatpush1.msra.mxu0 0.0
    %519 = vmatprep.subr.mxu0 0.0
    %520 = vmatpush1.msra.mxu0 0.0
    %521 = vmatprep.subr.mxu0 0.0
    %522 = vmatpush1.msra.mxu0 0.0
    %523 = vmatprep.subr.mxu0 0.0
    %524 = vmatpush1.msra.mxu0 0.0
    %525 = vmatprep.subr.mxu0 0.0
    %526 = vmatpush1.msra.mxu0 0.0
    %527 = vmatprep.subr.mxu0 0.0
    %528 = vmatpush1.msra.mxu0 0.0
    %529 = vmatprep.subr.mxu0 0.0
    %530 = vmatpush1.msra.mxu0 0.0
    %531 = vmatprep.subr.mxu0 0.0
    %532 = vmatpush1.msra.mxu0 0.0
    %533 = vmatprep.subr.mxu0 0.0
    %534 = vmatpush1.msra.mxu0 0.0
    %535 = vmatprep.subr.mxu0 0.0
    %536 = vmatpush1.msra.mxu0 0.0
    %537 = vmatprep.subr.mxu0 0.0
    %538 = vmatpush1.msra.mxu0 0.0
    %539 = vmatprep.subr.mxu0 0.0
    %540 = vmatpush1.msra.mxu0 0.0
    %541 = vmatprep.subr.mxu0 0.0
    %542 = vmatpush1.msra.mxu0 0.0
    %543 = vmatprep.subr.mxu0 0.0
    %544 = vmatpush1.msra.mxu0 0.0
    %545 = vmatprep.subr.mxu0 0.0
    %546 = vmatpush1.msra.mxu0 0.0
    %547 = vmatprep.subr.mxu0 0.0
    %548 = vmatpush1.msra.mxu0 0.0
    %549 = vmatprep.subr.mxu0 0.0
    %550 = vmatpush1.msra.mxu0 0.0
    %551 = vmatprep.subr.mxu0 0.0
    %552 = vmatpush1.msra.mxu0 0.0
    %553 = vmatprep.subr.mxu0 0.0
    %554 = vmatpush1.msra.mxu0 0.0
    %555 = vmatprep.subr.mxu0 0.0
    %556 = vmatpush1.msra.mxu0 0.0
    %557 = vmatprep.subr.mxu0 0.0
    %558 = vmatpush1.msra.mxu0 0.0
    %559 = vmatprep.mubr.f32.mxu0 0.0
    %560 = vmatmul.mubr.f32.gmra.mrb[0].mxu0 %v493
    %v561 = vpop.f32.mrb[0].mxu0
    %v562 = vadd.f32 %v50, %v561
    %v563 = vpop.f32.mrb[0].mxu0
    %564 = vdwg.mxu0
    %v565 = vxor.u32 %v562, 2147483648
    %v566 = vmul.f32 %v565, 1.442695
    %v567 = vpow.pop %v566
    %v568 = vadd.f32 %v567, 1.0
    %v569 = vrcp.pop %v568
    %v570 = vmul.f32 1.0, %v569
    %v571 = vtanh.pop %v562
    %v572 = vmul.f32 %v570, %v473
    %574 = vrot.lane.b32.xlu0 %v571, 64
    %v575 = vpop.permute.xlu0 %574
    %v577 = vmul.f32 %v570, %v575
    %579 = vrot.lane.b32.xlu0 %v577, 32
    %v580 = vpop.permute.xlu0 %579
    %v582 = vadd.f32 %v572, %v580
    %v583 = vtanh.pop %v582
    %585 = vrot.lane.b32.xlu0 %v583, 64
    %v586 = vpop.permute.xlu0 %585
    %v588 = vmul.f32 %v570, %v586
    %590 = vrot.lane.b32.xlu0 %v588, 32
    %v591 = vpop.permute.xlu0 %590
    %s593 = scalar_lea.vmem %s3, 8
    %594 = vst.msk [vmem:[%s593] sm:$0x3] %vm157, %v591
    %s595 = scalar_lea.vmem %s0, 10
    %v596 = vld [vmem:[%s595] sm:$0x3]
    %597 = vrot.lane.b32.xlu0 %v588, 48
    %v598 = vpop.permute.xlu0 %597
    %v600 = vsel %vm45, %v596, %v598
    %v602 = vsel %vm51, %v600, 0
    %604 = vmatprep.subr.mxu0 0.0
    %605 = vmatpush1.msra.mxu0 %v30
    %606 = vmatprep.subr.mxu0 0.0
    %607 = vmatpush1.msra.mxu0 %v31
    %608 = vmatprep.subr.mxu0 0.0
    %609 = vmatpush1.msra.mxu0 %v32
    %610 = vmatprep.subr.mxu0 0.0
    %611 = vmatpush1.msra.mxu0 %v33
    %612 = vmatprep.subr.mxu0 0.0
    %613 = vmatpush1.msra.mxu0 %v34
    %614 = vmatprep.subr.mxu0 0.0
    %615 = vmatpush1.msra.mxu0 %v35
    %616 = vmatprep.subr.mxu0 0.0
    %617 = vmatpush1.msra.mxu0 0.0
    %618 = vmatprep.subr.mxu0 0.0
    %619 = vmatpush1.msra.mxu0 0.0
    %620 = vmatprep.subr.mxu0 0.0
    %621 = vmatpush1.msra.mxu0 0.0
    %622 = vmatprep.subr.mxu0 0.0
    %623 = vmatpush1.msra.mxu0 0.0
    %624 = vmatprep.subr.mxu0 0.0
    %625 = vmatpush1.msra.mxu0 0.0
    %626 = vmatprep.subr.mxu0 0.0
    %627 = vmatpush1.msra.mxu0 0.0
    %628 = vmatprep.subr.mxu0 0.0
    %629 = vmatpush1.msra.mxu0 0.0
    %630 = vmatprep.subr.mxu0 0.0
    %631 = vmatpush1.msra.mxu0 0.0
    %632 = vmatprep.subr.mxu0 0.0
    %633 = vmatpush1.msra.mxu0 0.0
    %634 = vmatprep.subr.mxu0 0.0
    %635 = vmatpush1.msra.mxu0 0.0
    %636 = vmatprep.subr.mxu0 0.0
    %637 = vmatpush1.msra.mxu0 0.0
    %638 = vmatprep.subr.mxu0 0.0
    %639 = vmatpush1.msra.mxu0 0.0
    %640 = vmatprep.subr.mxu0 0.0
    %641 = vmatpush1.msra.mxu0 0.0
    %642 = vmatprep.subr.mxu0 0.0
    %643 = vmatpush1.msra.mxu0 0.0
    %644 = vmatprep.subr.mxu0 0.0
    %645 = vmatpush1.msra.mxu0 0.0
    %646 = vmatprep.subr.mxu0 0.0
    %647 = vmatpush1.msra.mxu0 0.0
    %648 = vmatprep.subr.mxu0 0.0
    %649 = vmatpush1.msra.mxu0 0.0
    %650 = vmatprep.subr.mxu0 0.0
    %651 = vmatpush1.msra.mxu0 0.0
    %652 = vmatprep.subr.mxu0 0.0
    %653 = vmatpush1.msra.mxu0 0.0
    %654 = vmatprep.subr.mxu0 0.0
    %655 = vmatpush1.msra.mxu0 0.0
    %656 = vmatprep.subr.mxu0 0.0
    %657 = vmatpush1.msra.mxu0 0.0
    %658 = vmatprep.subr.mxu0 0.0
    %659 = vmatpush1.msra.mxu0 0.0
    %660 = vmatprep.subr.mxu0 0.0
    %661 = vmatpush1.msra.mxu0 0.0
    %662 = vmatprep.subr.mxu0 0.0
    %663 = vmatpush1.msra.mxu0 0.0
    %664 = vmatprep.subr.mxu0 0.0
    %665 = vmatpush1.msra.mxu0 0.0
    %666 = vmatprep.subr.mxu0 0.0
    %667 = vmatpush1.msra.mxu0 0.0
    %668 = vmatprep.mubr.f32.mxu0 0.0
    %669 = vmatmul.mubr.f32.gmra.mrb[0].mxu0 %v602
    %v670 = vpop.f32.mrb[0].mxu0
    %v671 = vadd.f32 %v50, %v670
    %v672 = vpop.f32.mrb[0].mxu0
    %673 = vdwg.mxu0
    %v674 = vxor.u32 %v671, 2147483648
    %v675 = vmul.f32 %v674, 1.442695
    %v676 = vpow.pop %v675
    %v677 = vadd.f32 %v676, 1.0
    %v678 = vrcp.pop %v677
    %v679 = vmul.f32 1.0, %v678
    %v680 = vtanh.pop %v671
    %v681 = vmul.f32 %v679, %v582
    %683 = vrot.lane.b32.xlu0 %v680, 64
    %v684 = vpop.permute.xlu0 %683
    %v686 = vmul.f32 %v679, %v684
    %688 = vrot.lane.b32.xlu0 %v686, 32
    %v689 = vpop.permute.xlu0 %688
    %v691 = vadd.f32 %v681, %v689
    %v692 = vtanh.pop %v691
    %694 = vrot.lane.b32.xlu0 %v692, 64
    %v695 = vpop.permute.xlu0 %694
    %v697 = vmul.f32 %v679, %v695
    %699 = vrot.lane.b32.xlu0 %v697, 32
    %v700 = vpop.permute.xlu0 %699
    %s702 = scalar_lea.vmem %s3, 10
    %703 = vst.msk [vmem:[%s702] sm:$0x3] %vm157, %v700
    %s704 = scalar_lea.vmem %s0, 12
    %v705 = vld [vmem:[%s704] sm:$0x3]
    %706 = vrot.lane.b32.xlu0 %v697, 48
    %v707 = vpop.permute.xlu0 %706
    %v709 = vsel %vm45, %v705, %v707
    %v711 = vsel %vm51, %v709, 0
    %713 = vmatprep.subr.mxu0 0.0
    %714 = vmatpush1.msra.mxu0 %v30
    %715 = vmatprep.subr.mxu0 0.0
    %716 = vmatpush1.msra.mxu0 %v31
    %717 = vmatprep.subr.mxu0 0.0
    %718 = vmatpush1.msra.mxu0 %v32
    %719 = vmatprep.subr.mxu0 0.0
    %720 = vmatpush1.msra.mxu0 %v33
    %721 = vmatprep.subr.mxu0 0.0
    %722 = vmatpush1.msra.mxu0 %v34
    %723 = vmatprep.subr.mxu0 0.0
    %724 = vmatpush1.msra.mxu0 %v35
    %725 = vmatprep.subr.mxu0 0.0
    %726 = vmatpush1.msra.mxu0 0.0
    %727 = vmatprep.subr.mxu0 0.0
    %728 = vmatpush1.msra.mxu0 0.0
    %729 = vmatprep.subr.mxu0 0.0
    %730 = vmatpush1.msra.mxu0 0.0
    %731 = vmatprep.subr.mxu0 0.0
    %732 = vmatpush1.msra.mxu0 0.0
    %733 = vmatprep.subr.mxu0 0.0
    %734 = vmatpush1.msra.mxu0 0.0
    %735 = vmatprep.subr.mxu0 0.0
    %736 = vmatpush1.msra.mxu0 0.0
    %737 = vmatprep.subr.mxu0 0.0
    %738 = vmatpush1.msra.mxu0 0.0
    %739 = vmatprep.subr.mxu0 0.0
    %740 = vmatpush1.msra.mxu0 0.0
    %741 = vmatprep.subr.mxu0 0.0
    %742 = vmatpush1.msra.mxu0 0.0
    %743 = vmatprep.subr.mxu0 0.0
    %744 = vmatpush1.msra.mxu0 0.0
    %745 = vmatprep.subr.mxu0 0.0
    %746 = vmatpush1.msra.mxu0 0.0
    %747 = vmatprep.subr.mxu0 0.0
    %748 = vmatpush1.msra.mxu0 0.0
    %749 = vmatprep.subr.mxu0 0.0
    %750 = vmatpush1.msra.mxu0 0.0
    %751 = vmatprep.subr.mxu0 0.0
    %752 = vmatpush1.msra.mxu0 0.0
    %753 = vmatprep.subr.mxu0 0.0
    %754 = vmatpush1.msra.mxu0 0.0
    %755 = vmatprep.subr.mxu0 0.0
    %756 = vmatpush1.msra.mxu0 0.0
    %757 = vmatprep.subr.mxu0 0.0
    %758 = vmatpush1.msra.mxu0 0.0
    %759 = vmatprep.subr.mxu0 0.0
    %760 = vmatpush1.msra.mxu0 0.0
    %761 = vmatprep.subr.mxu0 0.0
    %762 = vmatpush1.msra.mxu0 0.0
    %763 = vmatprep.subr.mxu0 0.0
    %764 = vmatpush1.msra.mxu0 0.0
    %765 = vmatprep.subr.mxu0 0.0
    %766 = vmatpush1.msra.mxu0 0.0
    %767 = vmatprep.subr.mxu0 0.0
    %768 = vmatpush1.msra.mxu0 0.0
    %769 = vmatprep.subr.mxu0 0.0
    %770 = vmatpush1.msra.mxu0 0.0
    %771 = vmatprep.subr.mxu0 0.0
    %772 = vmatpush1.msra.mxu0 0.0
    %773 = vmatprep.subr.mxu0 0.0
    %774 = vmatpush1.msra.mxu0 0.0
    %775 = vmatprep.subr.mxu0 0.0
    %776 = vmatpush1.msra.mxu0 0.0
    %777 = vmatprep.mubr.f32.mxu0 0.0
    %778 = vmatmul.mubr.f32.gmra.mrb[0].mxu0 %v711
    %v779 = vpop.f32.mrb[0].mxu0
    %v780 = vadd.f32 %v50, %v779
    %v781 = vpop.f32.mrb[0].mxu0
    %782 = vdwg.mxu0
    %v783 = vxor.u32 %v780, 2147483648
    %v784 = vmul.f32 %v783, 1.442695
    %v785 = vpow.pop %v784
    %v786 = vadd.f32 %v785, 1.0
    %v787 = vrcp.pop %v786
    %v788 = vmul.f32 1.0, %v787
    %v789 = vtanh.pop %v780
    %v790 = vmul.f32 %v788, %v691
    %792 = vrot.lane.b32.xlu0 %v789, 64
    %v793 = vpop.permute.xlu0 %792
    %v795 = vmul.f32 %v788, %v793
    %797 = vrot.lane.b32.xlu0 %v795, 32
    %v798 = vpop.permute.xlu0 %797
    %v800 = vadd.f32 %v790, %v798
    %v801 = vtanh.pop %v800
    %803 = vrot.lane.b32.xlu0 %v801, 64
    %v804 = vpop.permute.xlu0 %803
    %v806 = vmul.f32 %v788, %v804
    %808 = vrot.lane.b32.xlu0 %v806, 32
    %v809 = vpop.permute.xlu0 %808
    %s811 = scalar_lea.vmem %s3, 12
    %812 = vst.msk [vmem:[%s811] sm:$0x3] %vm157, %v809
    %s813 = scalar_lea.vmem %s0, 14
    %v814 = vld [vmem:[%s813] sm:$0x3]
    %815 = vrot.lane.b32.xlu0 %v806, 48
    %v816 = vpop.permute.xlu0 %815
    %v818 = vsel %vm45, %v814, %v816
    %v820 = vsel %vm51, %v818, 0
    %822 = vmatprep.subr.mxu0 0.0
    %823 = vmatpush1.msra.mxu0 %v30
    %824 = vmatprep.subr.mxu0 0.0
    %825 = vmatpush1.msra.mxu0 %v31
    %826 = vmatprep.subr.mxu0 0.0
    %827 = vmatpush1.msra.mxu0 %v32
    %828 = vmatprep.subr.mxu0 0.0
    %829 = vmatpush1.msra.mxu0 %v33
    %830 = vmatprep.subr.mxu0 0.0
    %831 = vmatpush1.msra.mxu0 %v34
    %832 = vmatprep.subr.mxu0 0.0
    %833 = vmatpush1.msra.mxu0 %v35
    %834 = vmatprep.subr.mxu0 0.0
    %835 = vmatpush1.msra.mxu0 0.0
    %836 = vmatprep.subr.mxu0 0.0
    %837 = vmatpush1.msra.mxu0 0.0
    %838 = vmatprep.subr.mxu0 0.0
    %839 = vmatpush1.msra.mxu0 0.0
    %840 = vmatprep.subr.mxu0 0.0
    %841 = vmatpush1.msra.mxu0 0.0
    %842 = vmatprep.subr.mxu0 0.0
    %843 = vmatpush1.msra.mxu0 0.0
    %844 = vmatprep.subr.mxu0 0.0
    %845 = vmatpush1.msra.mxu0 0.0
    %846 = vmatprep.subr.mxu0 0.0
    %847 = vmatpush1.msra.mxu0 0.0
    %848 = vmatprep.subr.mxu0 0.0
    %849 = vmatpush1.msra.mxu0 0.0
    %850 = vmatprep.subr.mxu0 0.0
    %851 = vmatpush1.msra.mxu0 0.0
    %852 = vmatprep.subr.mxu0 0.0
    %853 = vmatpush1.msra.mxu0 0.0
    %854 = vmatprep.subr.mxu0 0.0
    %855 = vmatpush1.msra.mxu0 0.0
    %856 = vmatprep.subr.mxu0 0.0
    %857 = vmatpush1.msra.mxu0 0.0
    %858 = vmatprep.subr.mxu0 0.0
    %859 = vmatpush1.msra.mxu0 0.0
    %860 = vmatprep.subr.mxu0 0.0
    %861 = vmatpush1.msra.mxu0 0.0
    %862 = vmatprep.subr.mxu0 0.0
    %863 = vmatpush1.msra.mxu0 0.0
    %864 = vmatprep.subr.mxu0 0.0
    %865 = vmatpush1.msra.mxu0 0.0
    %866 = vmatprep.subr.mxu0 0.0
    %867 = vmatpush1.msra.mxu0 0.0
    %868 = vmatprep.subr.mxu0 0.0
    %869 = vmatpush1.msra.mxu0 0.0
    %870 = vmatprep.subr.mxu0 0.0
    %871 = vmatpush1.msra.mxu0 0.0
    %872 = vmatprep.subr.mxu0 0.0
    %873 = vmatpush1.msra.mxu0 0.0
    %874 = vmatprep.subr.mxu0 0.0
    %875 = vmatpush1.msra.mxu0 0.0
    %876 = vmatprep.subr.mxu0 0.0
    %877 = vmatpush1.msra.mxu0 0.0
    %878 = vmatprep.subr.mxu0 0.0
    %879 = vmatpush1.msra.mxu0 0.0
    %880 = vmatprep.subr.mxu0 0.0
    %881 = vmatpush1.msra.mxu0 0.0
    %882 = vmatprep.subr.mxu0 0.0
    %883 = vmatpush1.msra.mxu0 0.0
    %884 = vmatprep.subr.mxu0 0.0
    %885 = vmatpush1.msra.mxu0 0.0
    %886 = vmatprep.mubr.f32.mxu0 0.0
    %887 = vmatmul.mubr.f32.gmra.mrb[0].mxu0 %v820
    %v888 = vpop.f32.mrb[0].mxu0
    %v889 = vadd.f32 %v50, %v888
    %v890 = vpop.f32.mrb[0].mxu0
    %891 = vdwg.mxu0
    %v892 = vxor.u32 %v889, 2147483648
    %v893 = vmul.f32 %v892, 1.442695
    %v894 = vpow.pop %v893
    %v895 = vadd.f32 %v894, 1.0
    %v896 = vrcp.pop %v895
    %v897 = vmul.f32 1.0, %v896
    %v898 = vtanh.pop %v889
    %v899 = vmul.f32 %v897, %v800
    %901 = vrot.lane.b32.xlu0 %v898, 64
    %v902 = vpop.permute.xlu0 %901
    %v904 = vmul.f32 %v897, %v902
    %906 = vrot.lane.b32.xlu0 %v904, 32
    %v907 = vpop.permute.xlu0 %906
    %v909 = vadd.f32 %v899, %v907
    %v910 = vtanh.pop %v909
    %912 = vrot.lane.b32.xlu0 %v910, 64
    %v913 = vpop.permute.xlu0 %912
    %v915 = vmul.f32 %v897, %v913
    %917 = vrot.lane.b32.xlu0 %v915, 32
    %v918 = vpop.permute.xlu0 %917
    %s920 = scalar_lea.vmem %s3, 14
    %921 = vst.msk [vmem:[%s920] sm:$0x3] %vm157, %v918
    %922 = vst.msk [vmem:[%s4] sm:$0x3] %vm157, %v918
    %924 = vrot.lane.b32.xlu0 %v909, 96
    %v925 = vpop.permute.xlu0 %924
    %s927 = scalar_lea.vmem %s4, 2
    %928 = vst.msk [vmem:[%s927] sm:$0x3] %vm157, %v925
    // Predicated region
    $region18: #{encoder_forward.1} parent=1 // pred_check
      _
    $region19: #{encoder_forward.1} parent=1 // pred_check_branch
      %930 = sbr.rel (0) target = $region21
    $region20: #{encoder_forward.1} parent=1 // pred_region
      _
    $region21: #{encoder_forward.1} parent=1 // pred_fallthru
      _
    // Predicated region
    $region22: #{encoder_forward.1} parent=1 // pred_check
      _
    $region23: #{encoder_forward.1} parent=1 // pred_check_branch
      %932 = sbr.rel (0) target = $region25
    $region24: #{encoder_forward.1} parent=1 // pred_region
      _
    $region25: #{encoder_forward.1} parent=1 // pred_fallthru
      _
    // Predicated region
    $region26: #{encoder_forward.1} parent=1 // pred_check
      _
    $region27: #{encoder_forward.1} parent=1 // pred_check_branch
      %934 = sbr.rel (0) target = $region29
    $region28: #{encoder_forward.1} parent=1 // pred_region
      _
    $region29: #{encoder_forward.1} parent=1 // pred_fallthru
      _
    // Predicated region
    $region30: #{encoder_forward.1} parent=1 // pred_check
      _
    $region31: #{encoder_forward.1} parent=1 // pred_check_branch
      %936 = sbr.rel (0) target = $region33
    $region32: #{encoder_forward.1} parent=1 // pred_region
      _
    $region33: #{encoder_forward.1} parent=1 // pred_fallthru
      _
    %937 = vsyncpa [#allocation3], 1

</llo_original>
